<compile_context>
chip_gen: v7x
topology: tpu7x:2x2x1
jax: 0.10.0
libtpu: 0.0.40
codegen_flags: <defaults>
</compile_context>

<pallas_src>
import math

import jax
import jax.numpy as jnp
from jax.experimental import pallas as pl
from jax.experimental.pallas import tpu as pltpu


def _round_up(x, m):
    return ((x + m - 1) // m) * m


def _flipflop_seq_kernel(
    x_ref,      # (TB, I)      bf16  layer input (constant across t)
    h0_ref,     # (TB, Hp)     f32   initial hidden state
    wxg_ref,    # (I, 2*Hp)    bf16  [Wjx.T | Wkx.T]   (zero padded)
    whg_ref,    # (Hp, 2*Hp)   bf16  [Wjh.T | Wkh.T]   (zero padded)
    bg_ref,     # (1, 2*Hp)    f32   [bjx+bjh | bkx+bkh]
    wo_ref,     # (Hp, Op)     bf16  Wo.T              (zero padded)
    bo_ref,     # (1, Op)      f32
    out_ref,    # (1, TB, Op)  f32   output block for timestep t
    hfin_ref,   # (TB, Hp)     f32   final hidden state (written at t == T-1)
    h_scr,      # (TB, Hp)     f32   recurrent carry
    xg_scr,     # (TB, 2*Hp)   f32   loop-invariant input gate contribution
):
    t = pl.program_id(1)
    hp = whg_ref.shape[0]

    @pl.when(t == 0)
    def _init():
        # Loop-invariant: x @ [Wjx.T | Wkx.T] + (bj | bk). Computed once per
        # batch block, reused for every timestep.
        xg_scr[...] = (
            jnp.dot(x_ref[...], wxg_ref[...], preferred_element_type=jnp.float32)
            + bg_ref[...]
        )
        h_scr[...] = h0_ref[...]

    h = h_scr[...]

    # One fused MXU matmul produces both gate pre-activations.
    gates = xg_scr[...] + jnp.dot(
        h.astype(jnp.bfloat16), whg_ref[...], preferred_element_type=jnp.float32
    )
    j = jax.nn.sigmoid(gates[:, :hp])
    k = jax.nn.sigmoid(gates[:, hp:])

    new_h = j * (1.0 - h) + (1.0 - k) * h
    h_scr[...] = new_h

    out = (
        jnp.dot(new_h.astype(jnp.bfloat16), wo_ref[...],
                preferred_element_type=jnp.float32)
        + bo_ref[...]
    )
    out_ref[0] = out.astype(out_ref.dtype)

    @pl.when(t == pl.num_programs(1) - 1)
    def _finalize():
        hfin_ref[...] = new_h.astype(hfin_ref.dtype)


def flipflop_layer_forward(x, seq_length, params, h0=None):
    """Fused SignalFlipFlopLayerSTDP forward.

    Args:
      x:  (B, input_size) — repeated for every timestep (matches the module).
      seq_length: number of timesteps T.
      params: torch-layout weights:
        'wjx','wkx': (hidden, input)  'wjh','wkh': (hidden, hidden)
        'wo': (output, hidden)        biases 'b*': (out_features,)
      h0: optional (B, hidden) initial hidden state (zeros if None).
    Returns:
      outputs (B, T, output_size), final hidden state (B, hidden_size).
    """
    B, I = x.shape
    H = params["wjh"].shape[0]
    O = params["wo"].shape[0]
    T = int(seq_length)

    f32, bf16 = jnp.float32, jnp.bfloat16

    # Lane-dense padding of the feature axes.
    Hp = _round_up(H, 128)
    Op = _round_up(O, 128)

    # Batch tiling: full (padded) batch for small B, 256-row tiles for large B.
    TB = 256 if B >= 256 else _round_up(B, 8)
    Bp = _round_up(B, TB)
    nb = Bp // TB

    def pad2(a, rows, cols):
        return jnp.pad(a, ((0, rows - a.shape[0]), (0, cols - a.shape[1])))

    # --- Weight prep (wrapper-side, one-time): transpose to (in, out), fuse, pad.
    wxg = jnp.concatenate(
        [pad2(params["wjx"].T, I, Hp), pad2(params["wkx"].T, I, Hp)], axis=1
    ).astype(bf16)                                               # (I, 2*Hp)
    whg = jnp.concatenate(
        [pad2(params["wjh"].T, Hp, Hp), pad2(params["wkh"].T, Hp, Hp)], axis=1
    ).astype(bf16)                                               # (Hp, 2*Hp)
    bj = params["bjx"] + params["bjh"]
    bk = params["bkx"] + params["bkh"]
    bg = jnp.concatenate(
        [jnp.pad(bj, (0, Hp - H)), jnp.pad(bk, (0, Hp - H))]
    ).reshape(1, 2 * Hp).astype(f32)                             # (1, 2*Hp)
    wo = pad2(params["wo"].T, Hp, Op).astype(bf16)               # (Hp, Op)
    bo = jnp.pad(params["bo"], (0, Op - O)).reshape(1, Op).astype(f32)

    if h0 is None:
        h0 = jnp.zeros((B, H), f32)
    x_p = pad2(x, Bp, I).astype(bf16)                            # (Bp, I)
    h0_p = pad2(h0.astype(f32), Bp, Hp)                          # (Bp, Hp)

    # Explicit per-operand specs (no closure over a loop variable).
    in_specs = [
        pl.BlockSpec((TB, I), lambda b, t: (b, 0)),          # x
        pl.BlockSpec((TB, Hp), lambda b, t: (b, 0)),         # h0
        pl.BlockSpec((I, 2 * Hp), lambda b, t: (0, 0)),      # wxg (resident)
        pl.BlockSpec((Hp, 2 * Hp), lambda b, t: (0, 0)),     # whg (resident)
        pl.BlockSpec((1, 2 * Hp), lambda b, t: (0, 0)),      # bg  (resident)
        pl.BlockSpec((Hp, Op), lambda b, t: (0, 0)),         # wo  (resident)
        pl.BlockSpec((1, Op), lambda b, t: (0, 0)),          # bo  (resident)
    ]
    out_specs = (
        pl.BlockSpec((1, TB, Op), lambda b, t: (t, b, 0)),   # outputs per step
        pl.BlockSpec((TB, Hp), lambda b, t: (b, 0)),         # final hidden
    )
    out_shape = (
        jax.ShapeDtypeStruct((T, Bp, Op), f32),
        jax.ShapeDtypeStruct((Bp, Hp), f32),
    )
    scratch_shapes = [
        pltpu.VMEM((TB, Hp), f32),       # hidden-state carry
        pltpu.VMEM((TB, 2 * Hp), f32),   # loop-invariant x-gate contribution
    ]

    # VMEM budget derived from actual operand sizes (double-buffered) + headroom,
    # clamped to fit v7x's 64 MiB per-core VMEM.
    def nbytes(shape, dt):
        return math.prod(shape) * jnp.dtype(dt).itemsize

    block_bytes = (
        nbytes((TB, I), bf16) + nbytes((TB, Hp), f32)
        + nbytes((I, 2 * Hp), bf16) + nbytes((Hp, 2 * Hp), bf16)
        + nbytes((1, 2 * Hp), f32) + nbytes((Hp, Op), bf16) + nbytes((1, Op), f32)
        + nbytes((1, TB, Op), f32) + nbytes((TB, Hp), f32)
    )
    scratch_bytes = nbytes((TB, Hp), f32) + nbytes((TB, 2 * Hp), f32)
    vmem_limit = int(min(max(2 * block_bytes + scratch_bytes + (4 << 20),
                             16 << 20), 56 << 20))

    outputs_p, hfin_p = pl.pallas_call(
        _flipflop_seq_kernel,
        grid_spec=pltpu.PrefetchScalarGridSpec(
            num_scalar_prefetch=0,
            grid=(nb, T),
            in_specs=in_specs,
            out_specs=out_specs,
            scratch_shapes=scratch_shapes,
        ),
        out_shape=out_shape,
        compiler_params=pltpu.CompilerParams(
            dimension_semantics=("parallel", "arbitrary"),
            vmem_limit_bytes=vmem_limit,
        ),
    )(x_p, h0_p, wxg, whg, bg, wo, bo)

    outputs = jnp.transpose(outputs_p[:, :B, :O], (1, 0, 2)).astype(x.dtype)
    h_final = hfin_p[:B, :H].astype(x.dtype)
    return outputs, h_final


def init_params(key, input_size, hidden_size, output_size, dtype=jnp.float32):
    """Deterministic PyTorch-Linear-style init: U(-1/sqrt(fan_in), 1/sqrt(fan_in))."""
    keys = jax.random.split(key, 10)

    def lin(kw, kb, fan_in, fan_out):
        bound = 1.0 / jnp.sqrt(fan_in)
        w = jax.random.uniform(kw, (fan_out, fan_in), dtype, -bound, bound)
        b = jax.random.uniform(kb, (fan_out,), dtype, -bound, bound)
        return w, b

    wjx, bjx = lin(keys[0], keys[1], input_size, hidden_size)
    wjh, bjh = lin(keys[2], keys[3], hidden_size, hidden_size)
    wkx, bkx = lin(keys[4], keys[5], input_size, hidden_size)
    wkh, bkh = lin(keys[6], keys[7], hidden_size, hidden_size)
    wo, bo = lin(keys[8], keys[9], hidden_size, output_size)
    return dict(
        wjx=wjx, bjx=bjx, wjh=wjh, bjh=bjh,
        wkx=wkx, bkx=bkx, wkh=wkh, bkh=bkh,
        wo=wo, bo=bo,
    )


def _reference_forward(x, seq_length, params, h0=None):
    """Pure-JAX f32 reference mirroring the PyTorch layer (STDP side effect omitted)."""
    B = x.shape[0]
    H = params["wjh"].shape[0]
    h = jnp.zeros((B, H), x.dtype) if h0 is None else h0
    outs = []
    for _ in range(seq_length):
        j = jax.nn.sigmoid(
            x @ params["wjx"].T + params["bjx"] + h @ params["wjh"].T + params["bjh"]
        )
        k = jax.nn.sigmoid(
            x @ params["wkx"].T + params["bkx"] + h @ params["wkh"].T + params["bkh"]
        )
        h = j * (1.0 - h) + (1.0 - k) * h
        outs.append(h @ params["wo"].T + params["bo"])
    return jnp.stack(outs, axis=1), h


if __name__ == "__main__":
    input_size, hidden_size, output_size, seq_length = 16, 32, 8, 8
    batch = 4

    key = jax.random.PRNGKey(0)
    k_params, k_x, k_h = jax.random.split(key, 3)

    params = init_params(k_params, input_size, hidden_size, output_size)
    x = jax.random.normal(k_x, (batch, input_size), jnp.float32)
    h0 = jax.random.normal(k_h, (batch, hidden_size), jnp.float32)

    out, h_final = flipflop_layer_forward(x, seq_length, params, h0)
    out = jax.block_until_ready(out)
    h_final = jax.block_until_ready(h_final)

    ref_out, ref_h = _reference_forward(x, seq_length, params, h0)
    assert out.shape == (batch, seq_length, output_size)
    assert h_final.shape == (batch, hidden_size)
    # bf16 matmul operands (f32 accumulation) vs f32 reference -> loosened tolerance.
    assert jnp.allclose(out, ref_out, atol=5e-2, rtol=5e-2), (
        float(jnp.max(jnp.abs(out - ref_out))))
    assert jnp.allclose(h_final, ref_h, atol=5e-2, rtol=5e-2), (
        float(jnp.max(jnp.abs(h_final - ref_h))))

    print("KERNEL_OK")
</pallas_src>

<mosaic_0001>
module attributes {stable_mosaic.version = 11 : i64} {
  func.func @_flipflop_seq_kernel(%arg0: i32, %arg1: i32, %arg2: memref<8x16xbf16, #tpu.memory_space<vmem>>, %arg3: memref<8x128xf32, #tpu.memory_space<vmem>>, %arg4: memref<16x256xbf16, #tpu.memory_space<vmem>>, %arg5: memref<128x256xbf16, #tpu.memory_space<vmem>>, %arg6: memref<1x256xf32, #tpu.memory_space<vmem>>, %arg7: memref<128x128xbf16, #tpu.memory_space<vmem>>, %arg8: memref<1x128xf32, #tpu.memory_space<vmem>>, %arg9: memref<1x8x128xf32, #tpu.memory_space<vmem>>, %arg10: memref<8x128xf32, #tpu.memory_space<vmem>>, %arg11: memref<8x128xf32, #tpu.memory_space<vmem>>, %arg12: memref<8x256xf32, #tpu.memory_space<vmem>>) attributes {dimension_semantics = [#tpu.dimension_semantics<parallel>, #tpu.dimension_semantics<arbitrary>], iteration_bounds = array<i64: 1, 8>, scalar_prefetch = 0 : i64, scratch_operands = 2 : i64, tpu.core_type = #tpu.core_type<tc>, window_params = [{transform_indices = @transform_0, window_bounds = array<i64: 8, 16>}, {transform_indices = @transform_1, window_bounds = array<i64: 8, 128>}, {pipeline_mode = #tpu.pipeline_mode<synchronous>, transform_indices = @transform_2, window_bounds = array<i64: 16, 256>}, {pipeline_mode = #tpu.pipeline_mode<synchronous>, transform_indices = @transform_3, window_bounds = array<i64: 128, 256>}, {pipeline_mode = #tpu.pipeline_mode<synchronous>, transform_indices = @transform_4, window_bounds = array<i64: 1, 256>}, {pipeline_mode = #tpu.pipeline_mode<synchronous>, transform_indices = @transform_5, window_bounds = array<i64: 128, 128>}, {pipeline_mode = #tpu.pipeline_mode<synchronous>, transform_indices = @transform_6, window_bounds = array<i64: 1, 128>}, {transform_indices = @transform_7, window_bounds = array<i64: 1, 8, 128>}, {transform_indices = @transform_8, window_bounds = array<i64: 8, 128>}]} {
    %c0_i32 = arith.constant 0 : i32
    %0 = arith.cmpi eq, %arg1, %c0_i32 : i32
    %1 = arith.extui %0 : i1 to i32
    %c0_i32_0 = arith.constant 0 : i32
    %2 = arith.cmpi ne, %1, %c0_i32_0 : i32
    scf.if %2 {
      %c0_21 = arith.constant 0 : index
      %c0_22 = arith.constant 0 : index
      %41 = vector.load %arg2[%c0_21, %c0_22] : memref<8x16xbf16, #tpu.memory_space<vmem>>, vector<8x16xbf16>
      %c0_23 = arith.constant 0 : index
      %c0_24 = arith.constant 0 : index
      %42 = vector.load %arg4[%c0_23, %c0_24] : memref<16x256xbf16, #tpu.memory_space<vmem>>, vector<16x256xbf16>
      %cst_25 = arith.constant dense<0.000000e+00> : vector<8x256xf32>
      %43 = tpu.matmul %41, %42, %cst_25 {dimension_numbers = #tpu.dot_dimension_numbers<[1], [0], [0], [1], [0, 0, 1, 1], [], []>} : vector<8x16xbf16>, vector<16x256xbf16>, vector<8x256xf32> -> vector<8x256xf32>
      %c0_26 = arith.constant 0 : index
      %c0_27 = arith.constant 0 : index
      %44 = vector.load %arg6[%c0_26, %c0_27] : memref<1x256xf32, #tpu.memory_space<vmem>>, vector<1x256xf32>
      %45 = vector.broadcast %44 : vector<1x256xf32> to vector<8x256xf32>
      %46 = arith.addf %43, %45 : vector<8x256xf32>
      %c0_28 = arith.constant 0 : index
      %c0_29 = arith.constant 0 : index
      %47 = vector.load %arg12[%c0_28, %c0_29] : memref<8x256xf32, #tpu.memory_space<vmem>>, vector<8x256xf32>
      tpu.vector_store %arg12[%c0_28, %c0_29], %46 {strides = array<i32>} : memref<8x256xf32, #tpu.memory_space<vmem>>, vector<8x256xf32>,
      %c0_30 = arith.constant 0 : index
      %c0_31 = arith.constant 0 : index
      %48 = vector.load %arg3[%c0_30, %c0_31] : memref<8x128xf32, #tpu.memory_space<vmem>>, vector<8x128xf32>
      %c0_32 = arith.constant 0 : index
      %c0_33 = arith.constant 0 : index
      %49 = vector.load %arg11[%c0_32, %c0_33] : memref<8x128xf32, #tpu.memory_space<vmem>>, vector<8x128xf32>
      tpu.vector_store %arg11[%c0_32, %c0_33], %48 {strides = array<i32>} : memref<8x128xf32, #tpu.memory_space<vmem>>, vector<8x128xf32>,
    } else {
    }
    %c0 = arith.constant 0 : index
    %c0_1 = arith.constant 0 : index
    %3 = vector.load %arg11[%c0, %c0_1] : memref<8x128xf32, #tpu.memory_space<vmem>>, vector<8x128xf32>
    %c0_2 = arith.constant 0 : index
    %c0_3 = arith.constant 0 : index
    %4 = vector.load %arg12[%c0_2, %c0_3] : memref<8x256xf32, #tpu.memory_space<vmem>>, vector<8x256xf32>
    %5 = arith.truncf %3 : vector<8x128xf32> to vector<8x128xbf16>
    %c0_4 = arith.constant 0 : index
    %c0_5 = arith.constant 0 : index
    %6 = vector.load %arg5[%c0_4, %c0_5] : memref<128x256xbf16, #tpu.memory_space<vmem>>, vector<128x256xbf16>
    %cst = arith.constant dense<0.000000e+00> : vector<8x256xf32>
    %7 = tpu.matmul %5, %6, %cst {dimension_numbers = #tpu.dot_dimension_numbers<[1], [0], [0], [1], [0, 0, 1, 1], [], []>} : vector<8x128xbf16>, vector<128x256xbf16>, vector<8x256xf32> -> vector<8x256xf32>
    %8 = arith.addf %4, %7 : vector<8x256xf32>
    %9 = vector.extract_strided_slice %8 {offsets = [0, 0], sizes = [8, 128], strides = [1, 1]} : vector<8x256xf32> to vector<8x128xf32>
    %10 = arith.negf %9 : vector<8x128xf32>
    %11 = math.exp %10 : vector<8x128xf32>
    %cst_6 = arith.constant 1.000000e+00 : f32
    %12 = vector.broadcast %cst_6 : f32 to vector<8x128xf32>
    %13 = arith.addf %12, %11 : vector<8x128xf32>
    %14 = arith.divf %12, %13 : vector<8x128xf32>
    %15 = vector.extract_strided_slice %8 {offsets = [0, 128], sizes = [8, 128], strides = [1, 1]} : vector<8x256xf32> to vector<8x128xf32>
    %16 = arith.negf %15 : vector<8x128xf32>
    %17 = math.exp %16 : vector<8x128xf32>
    %cst_7 = arith.constant 1.000000e+00 : f32
    %18 = vector.broadcast %cst_7 : f32 to vector<8x128xf32>
    %19 = arith.addf %18, %17 : vector<8x128xf32>
    %20 = arith.divf %18, %19 : vector<8x128xf32>
    %cst_8 = arith.constant 1.000000e+00 : f32
    %21 = vector.broadcast %cst_8 : f32 to vector<8x128xf32>
    %22 = arith.subf %21, %3 : vector<8x128xf32>
    %23 = arith.mulf %14, %22 : vector<8x128xf32>
    %cst_9 = arith.constant 1.000000e+00 : f32
    %24 = vector.broadcast %cst_9 : f32 to vector<8x128xf32>
    %25 = arith.subf %24, %20 : vector<8x128xf32>
    %26 = arith.mulf %25, %3 : vector<8x128xf32>
    %27 = arith.addf %23, %26 : vector<8x128xf32>
    %c0_10 = arith.constant 0 : index
    %c0_11 = arith.constant 0 : index
    %28 = vector.load %arg11[%c0_10, %c0_11] : memref<8x128xf32, #tpu.memory_space<vmem>>, vector<8x128xf32>
    tpu.vector_store %arg11[%c0_10, %c0_11], %27 {strides = array<i32>} : memref<8x128xf32, #tpu.memory_space<vmem>>, vector<8x128xf32>,
    %29 = arith.truncf %27 : vector<8x128xf32> to vector<8x128xbf16>
    %c0_12 = arith.constant 0 : index
    %c0_13 = arith.constant 0 : index
    %30 = vector.load %arg7[%c0_12, %c0_13] : memref<128x128xbf16, #tpu.memory_space<vmem>>, vector<128x128xbf16>
    %cst_14 = arith.constant dense<0.000000e+00> : vector<8x128xf32>
    %31 = tpu.matmul %29, %30, %cst_14 {dimension_numbers = #tpu.dot_dimension_numbers<[1], [0], [0], [1], [0, 0, 1, 1], [], []>} : vector<8x128xbf16>, vector<128x128xbf16>, vector<8x128xf32> -> vector<8x128xf32>
    %c0_15 = arith.constant 0 : index
    %c0_16 = arith.constant 0 : index
    %32 = vector.load %arg8[%c0_15, %c0_16] : memref<1x128xf32, #tpu.memory_space<vmem>>, vector<1x128xf32>
    %33 = vector.broadcast %32 : vector<1x128xf32> to vector<8x128xf32>
    %34 = arith.addf %31, %33 : vector<8x128xf32>
    %c0_17 = arith.constant 0 : index
    %c0_18 = arith.constant 0 : index
    %c0_19 = arith.constant 0 : index
    %35 = vector.load %arg9[%c0_17, %c0_18, %c0_19] : memref<1x8x128xf32, #tpu.memory_space<vmem>>, vector<1x8x128xf32>
    %36 = vector.shape_cast %35 : vector<1x8x128xf32> to vector<8x128xf32>
    %37 = vector.shape_cast %34 : vector<8x128xf32> to vector<1x8x128xf32>
    tpu.vector_store %arg9[%c0_17, %c0_18, %c0_19], %37 {strides = array<i32>} : memref<1x8x128xf32, #tpu.memory_space<vmem>>, vector<1x8x128xf32>,
    %c7_i32 = arith.constant 7 : i32
    %38 = arith.cmpi eq, %arg1, %c7_i32 : i32
    %39 = arith.extui %38 : i1 to i32
    %c0_i32_20 = arith.constant 0 : i32
    %40 = arith.cmpi ne, %39, %c0_i32_20 : i32
    scf.if %40 {
      %c0_21 = arith.constant 0 : index
      %c0_22 = arith.constant 0 : index
      %41 = vector.load %arg10[%c0_21, %c0_22] : memref<8x128xf32, #tpu.memory_space<vmem>>, vector<8x128xf32>
      tpu.vector_store %arg10[%c0_21, %c0_22], %27 {strides = array<i32>} : memref<8x128xf32, #tpu.memory_space<vmem>>, vector<8x128xf32>,
    } else {
    }
    return
  }
  func.func @transform_0(%arg0: i32, %arg1: i32) -> (i32, i32) {
    %c0_i32 = arith.constant 0 : i32
    %c0_i32_0 = arith.constant 0 : i32
    return %arg0, %c0_i32 : i32, i32
  }
  func.func @transform_1(%arg0: i32, %arg1: i32) -> (i32, i32) {
    %c0_i32 = arith.constant 0 : i32
    %c0_i32_0 = arith.constant 0 : i32
    return %arg0, %c0_i32 : i32, i32
  }
  func.func @transform_2(%arg0: i32, %arg1: i32) -> (i32, i32) {
    %c0_i32 = arith.constant 0 : i32
    %c0_i32_0 = arith.constant 0 : i32
    %c0_i32_1 = arith.constant 0 : i32
    return %c0_i32, %c0_i32_0 : i32, i32
  }
  func.func @transform_3(%arg0: i32, %arg1: i32) -> (i32, i32) {
    %c0_i32 = arith.constant 0 : i32
    %c0_i32_0 = arith.constant 0 : i32
    %c0_i32_1 = arith.constant 0 : i32
    return %c0_i32, %c0_i32_0 : i32, i32
  }
  func.func @transform_4(%arg0: i32, %arg1: i32) -> (i32, i32) {
    %c0_i32 = arith.constant 0 : i32
    %c0_i32_0 = arith.constant 0 : i32
    %c0_i32_1 = arith.constant 0 : i32
    return %c0_i32, %c0_i32_0 : i32, i32
  }
  func.func @transform_5(%arg0: i32, %arg1: i32) -> (i32, i32) {
    %c0_i32 = arith.constant 0 : i32
    %c0_i32_0 = arith.constant 0 : i32
    %c0_i32_1 = arith.constant 0 : i32
    return %c0_i32, %c0_i32_0 : i32, i32
  }
  func.func @transform_6(%arg0: i32, %arg1: i32) -> (i32, i32) {
    %c0_i32 = arith.constant 0 : i32
    %c0_i32_0 = arith.constant 0 : i32
    %c0_i32_1 = arith.constant 0 : i32
    return %c0_i32, %c0_i32_0 : i32, i32
  }
  func.func @transform_7(%arg0: i32, %arg1: i32) -> (i32, i32, i32) {
    %c0_i32 = arith.constant 0 : i32
    %c0_i32_0 = arith.constant 0 : i32
    return %arg1, %arg0, %c0_i32 : i32, i32, i32
  }
  func.func @transform_8(%arg0: i32, %arg1: i32) -> (i32, i32) {
    %c0_i32 = arith.constant 0 : i32
    %c0_i32_0 = arith.constant 0 : i32
    return %arg0, %c0_i32 : i32, i32
  }
}

</mosaic_0001>

<llo_original>
// kernel: tpu_custom_call.1
$region0: #{tpu_custom_call.1}
  #allocation0 [shape = 'u32[]', space=smem, size = 0x4, offset = 0x4, fixed_abs, tag = 'smem constant byte address 0x4 - core index']
  #allocation1 [shape = 'u32[144,128]{1,0:T(1,128)}', space=vmem, size = 0x12000, scoped, tag = 'internal scratch']
  #allocation2 [shape = 'f32[8,128]{1,0:T(8,128)}', space=vmem, size = 0x1000, scoped, tag = 'scratch operand']
  #allocation3 [shape = 'f32[8,256]{1,0:T(8,128)}', space=vmem, size = 0x2000, scoped, tag = 'scratch operand']
  %s0 = inlined_call_operand.hbm [shape: bf16[8,16], index: 0, kind: input, shape index: {}]
  %s1 = inlined_call_operand.hbm [shape: f32[8,128], index: 1, kind: input, shape index: {}]
  %s2 = inlined_call_operand.hbm [shape: bf16[16,256], index: 2, kind: input, shape index: {}]
  %s3 = inlined_call_operand.hbm [shape: bf16[128,256], index: 3, kind: input, shape index: {}]
  %s4 = inlined_call_operand.vmem [shape: f32[1,256], index: 4, kind: input, shape index: {}]
  %s5 = inlined_call_operand.hbm [shape: bf16[128,128], index: 5, kind: input, shape index: {}]
  %s6 = inlined_call_operand.vmem [shape: f32[1,128], index: 6, kind: input, shape index: {}]
  %s7 = inlined_call_operand.hbm [shape: f32[8,8,128], index: 7, kind: output, shape index: {0}]
  %s8 = inlined_call_operand.hbm [shape: f32[8,128], index: 8, kind: output, shape index: {1}]
  %9 = xla_tuple %s7, %s8
  %s10 = sld [smem:[#allocation0]]
  $region97: #{tpu_custom_call.1} parent=0
    _
  %s12 = ssub.s32 1, %s10
  %s13 = scalar_select 0, %s12, %s10
  $region1: #{tpu_custom_call.1} parent=0
    #allocation4 [shape = 'u8[2048]{0}', space=vmem, size = 0x800, scoped, tag = 'input window, operand 0, single buffered']
    #allocation5 [shape = 's32[2]{0}', space=sflag, size = 0x8, scoped, tag = 'scoped memory for tpu_custom_call.1']
    #allocation6 [shape = 's32[2]{0}', space=sflag, size = 0x8, scoped, tag = 'scoped memory for tpu_custom_call.1']
    #allocation7 [shape = 'u8[4096]{0}', space=vmem, size = 0x1000, scoped, tag = 'input window, operand 1, single buffered']
    #allocation8 [shape = 's32[1]{0}', space=sflag, size = 0x4, scoped, tag = 'scoped memory for tpu_custom_call.1']
    #allocation9 [shape = 'u8[8192]{0}', space=vmem, size = 0x2000, scoped, tag = 'input window, operand 2, single buffered']
    #allocation10 [shape = 'u8[65536]{0}', space=vmem, size = 0x10000, scoped, tag = 'input window, operand 3, single buffered']
    #allocation11 [shape = 's32[1]{0}', space=sflag, size = 0x4, scoped, tag = 'scoped memory for tpu_custom_call.1']
    #allocation12 [shape = 'u8[32768]{0}', space=vmem, size = 0x8000, scoped, tag = 'input window, operand 5, single buffered']
    #allocation13 [shape = 'u8[8192]{0}', space=vmem, size = 0x2000, scoped, tag = 'output window, operand 0']
    #allocation14 [shape = 'u8[4096]{0}', space=vmem, size = 0x1000, scoped, tag = 'output window, operand 1, single buffered']
    #allocation15 [shape = 's32[1]{0}', space=sflag, size = 0x4, scoped, tag = 'scoped memory for tpu_custom_call.1']
    %14 = vsyncpa [#allocation5], 0
    %15 = vsyncpa [#allocation8], 0
    %16 = vsyncpa [#allocation11], 0
    %17 = vsyncpa [#allocation6], 0
    %s18 = scalar_lea.sflag [#allocation6], 1
    %19 = vsyncpa %s18, 0
    %20 = vsyncpa [#allocation15], 0
    loop: start=0, step=1, limit=10
    $region2: #{tpu_custom_call.1} parent=1 // loop_pre_header
      _
    $region3: #{tpu_custom_call.1} parent=1 // loop_header
      %s22 = sphi 0, %s26
      %p23 = scmp.ge.s32.totalorder %s22, 10
      %s29 = sphi 0, %s41
      %s30 = sphi 0, %s37
      %s31 = sphi 0, %s29
      %s32 = sphi 0, %s30
      %s33 = sphi 0, %s31
      %s34 = sphi 0, %s32
      %s44 = sphi 0, %s46
      %s47 = sphi 0, %s44
      %s48 = sphi 0, %s47
      %s64 = sphi 0, %s48
      %s70 = sphi 0, %s72
      %s73 = sphi 0, %s70
      %s74 = sphi 0, %s73
      %s90 = sphi 0, %s74
      %s94 = sphi 0, %s94
      %s96 = sphi 0, %s94
      %s97 = sphi 0, %s96
      %s111 = sphi 0, %s97
      %s115 = sphi 0, %s115
      %s117 = sphi 0, %s115
      %s118 = sphi 0, %s117
      %s132 = sphi 0, %s118
      %s136 = sphi 0, %s136
      %s138 = sphi 0, %s136
      %s139 = sphi 0, %s138
      %s153 = sphi 0, %s139
      %s157 = sphi 0, %s157
      %s159 = sphi 0, %s157
      %s160 = sphi 0, %s159
      %s174 = sphi 0, %s160
      %s178 = sphi 0, %s178
      %s180 = sphi 0, %s178
      %s181 = sphi 0, %s180
      %s195 = sphi 0, %s181
      %s203 = sphi 0, %s205
      %s206 = sphi 0, %s203
      %s207 = sphi 0, %s206
      %s223 = sphi 0, %s207
      %s229 = sphi 0, %s231
      %s232 = sphi 0, %s229
      %s233 = sphi 0, %s232
      %s249 = sphi 0, %s233
    $region4: #{tpu_custom_call.1} parent=1 // loop_header_branch
      %25 = sbr.rel (%p23) target = $region8
    $region5: #{tpu_custom_call.1} parent=1 // loop_body
      %s27 = ssub.s32 %s22, 1
      %s28 = ssub.s32 %s22, 2
      %s35 = sadd.s32 1, %s30
      %p36 = scmp.ge.s32.totalorder %s35, 8
      %s37 = scalar_select %p36, 0, %s35
      %s38 = sadd.s32 1, %s29
      %s39 = scalar_select %p36, %s38, %s29
      %p40 = scmp.ge.s32.totalorder %s39, 1
      %s41 = scalar_select %p40, 0, %s39
      %s42 = ssub.s32 %s29, %s41
      %p43 = scmp.eq.s32.totalorder %s42, 0
      %s45 = sadd.s32 %s44, 1
      %s46 = scalar_select %p43, %s44, %s45
      %p49 = pneg %p43
      %p50 = scmp.eq.s32.totalorder %s22, 7
      %p51 = por %p49, %p50
      %p52 = scmp.ne.s32.totalorder %s44, %s47
      %p53 = scmp.eq.s32.totalorder %s22, 0
      %p54 = por %p52, %p53
      %p55 = scmp.ne.s32.totalorder %s44, %s47
      %p56 = scmp.eq.s32.totalorder %s27, 7
      %p57 = por %p55, %p56
      %p58 = scmp.ne.s32.totalorder %s47, %s48
      %p59 = scmp.eq.s32.totalorder %s27, 0
      %p60 = por %p58, %p59
      %p61 = scmp.ne.s32.totalorder %s47, %s48
      %p62 = scmp.eq.s32.totalorder %s28, 7
      %p63 = por %p61, %p62
      %p65 = scmp.ne.s32.totalorder %s48, %s64
      %p66 = scmp.eq.s32.totalorder %s28, 0
      %p67 = por %p65, %p66
      %s68 = ssub.s32 %s29, %s41
      %p69 = scmp.eq.s32.totalorder %s68, 0
      %s71 = sadd.s32 %s70, 1
      %s72 = scalar_select %p69, %s70, %s71
      %p75 = pneg %p69
      %p76 = scmp.eq.s32.totalorder %s22, 7
      %p77 = por %p75, %p76
      %p78 = scmp.ne.s32.totalorder %s70, %s73
      %p79 = scmp.eq.s32.totalorder %s22, 0
      %p80 = por %p78, %p79
      %p81 = scmp.ne.s32.totalorder %s70, %s73
      %p82 = scmp.eq.s32.totalorder %s27, 7
      %p83 = por %p81, %p82
      %p84 = scmp.ne.s32.totalorder %s73, %s74
      %p85 = scmp.eq.s32.totalorder %s27, 0
      %p86 = por %p84, %p85
      %p87 = scmp.ne.s32.totalorder %s73, %s74
      %p88 = scmp.eq.s32.totalorder %s28, 7
      %p89 = por %p87, %p88
      %p91 = scmp.ne.s32.totalorder %s74, %s90
      %p92 = scmp.eq.s32.totalorder %s28, 0
      %p93 = por %p91, %p92
      %s95 = sadd.s32 %s94, 1
      %p98 = scmp.eq.s32.totalorder %s22, 7
      %p99 = scmp.ne.s32.totalorder %s94, %s96
      %p100 = scmp.eq.s32.totalorder %s22, 0
      %p101 = por %p99, %p100
      %p102 = scmp.ne.s32.totalorder %s94, %s96
      %p103 = scmp.eq.s32.totalorder %s27, 7
      %p104 = por %p102, %p103
      %p105 = scmp.ne.s32.totalorder %s96, %s97
      %p106 = scmp.eq.s32.totalorder %s27, 0
      %p107 = por %p105, %p106
      %p108 = scmp.ne.s32.totalorder %s96, %s97
      %p109 = scmp.eq.s32.totalorder %s28, 7
      %p110 = por %p108, %p109
      %p112 = scmp.ne.s32.totalorder %s97, %s111
      %p113 = scmp.eq.s32.totalorder %s28, 0
      %p114 = por %p112, %p113
      %s116 = sadd.s32 %s115, 1
      %p119 = scmp.eq.s32.totalorder %s22, 7
      %p120 = scmp.ne.s32.totalorder %s115, %s117
      %p121 = scmp.eq.s32.totalorder %s22, 0
      %p122 = por %p120, %p121
      %p123 = scmp.ne.s32.totalorder %s115, %s117
      %p124 = scmp.eq.s32.totalorder %s27, 7
      %p125 = por %p123, %p124
      %p126 = scmp.ne.s32.totalorder %s117, %s118
      %p127 = scmp.eq.s32.totalorder %s27, 0
      %p128 = por %p126, %p127
      %p129 = scmp.ne.s32.totalorder %s117, %s118
      %p130 = scmp.eq.s32.totalorder %s28, 7
      %p131 = por %p129, %p130
      %p133 = scmp.ne.s32.totalorder %s118, %s132
      %p134 = scmp.eq.s32.totalorder %s28, 0
      %p135 = por %p133, %p134
      %s137 = sadd.s32 %s136, 1
      %p140 = scmp.eq.s32.totalorder %s22, 7
      %p141 = scmp.ne.s32.totalorder %s136, %s138
      %p142 = scmp.eq.s32.totalorder %s22, 0
      %p143 = por %p141, %p142
      %p144 = scmp.ne.s32.totalorder %s136, %s138
      %p145 = scmp.eq.s32.totalorder %s27, 7
      %p146 = por %p144, %p145
      %p147 = scmp.ne.s32.totalorder %s138, %s139
      %p148 = scmp.eq.s32.totalorder %s27, 0
      %p149 = por %p147, %p148
      %p150 = scmp.ne.s32.totalorder %s138, %s139
      %p151 = scmp.eq.s32.totalorder %s28, 7
      %p152 = por %p150, %p151
      %p154 = scmp.ne.s32.totalorder %s139, %s153
      %p155 = scmp.eq.s32.totalorder %s28, 0
      %p156 = por %p154, %p155
      %s158 = sadd.s32 %s157, 1
      %p161 = scmp.eq.s32.totalorder %s22, 7
      %p162 = scmp.ne.s32.totalorder %s157, %s159
      %p163 = scmp.eq.s32.totalorder %s22, 0
      %p164 = por %p162, %p163
      %p165 = scmp.ne.s32.totalorder %s157, %s159
      %p166 = scmp.eq.s32.totalorder %s27, 7
      %p167 = por %p165, %p166
      %p168 = scmp.ne.s32.totalorder %s159, %s160
      %p169 = scmp.eq.s32.totalorder %s27, 0
      %p170 = por %p168, %p169
      %p171 = scmp.ne.s32.totalorder %s159, %s160
      %p172 = scmp.eq.s32.totalorder %s28, 7
      %p173 = por %p171, %p172
      %p175 = scmp.ne.s32.totalorder %s160, %s174
      %p176 = scmp.eq.s32.totalorder %s28, 0
      %p177 = por %p175, %p176
      %s179 = sadd.s32 %s178, 1
      %p182 = scmp.eq.s32.totalorder %s22, 7
      %p183 = scmp.ne.s32.totalorder %s178, %s180
      %p184 = scmp.eq.s32.totalorder %s22, 0
      %p185 = por %p183, %p184
      %p186 = scmp.ne.s32.totalorder %s178, %s180
      %p187 = scmp.eq.s32.totalorder %s27, 7
      %p188 = por %p186, %p187
      %p189 = scmp.ne.s32.totalorder %s180, %s181
      %p190 = scmp.eq.s32.totalorder %s27, 0
      %p191 = por %p189, %p190
      %p192 = scmp.ne.s32.totalorder %s180, %s181
      %p193 = scmp.eq.s32.totalorder %s28, 7
      %p194 = por %p192, %p193
      %p196 = scmp.ne.s32.totalorder %s181, %s195
      %p197 = scmp.eq.s32.totalorder %s28, 0
      %p198 = por %p196, %p197
      %s199 = ssub.s32 %s30, %s37
      %s200 = ssub.s32 %s29, %s41
      %s201 = sor.u32 %s199, %s200
      %p202 = scmp.eq.s32.totalorder %s201, 0
      %s204 = sadd.s32 %s203, 1
      %s205 = scalar_select %p202, %s203, %s204
      %p208 = pneg %p202
      %p209 = scmp.eq.s32.totalorder %s22, 7
      %p210 = por %p208, %p209
      %p211 = scmp.ne.s32.totalorder %s203, %s206
      %p212 = scmp.eq.s32.totalorder %s22, 0
      %p213 = por %p211, %p212
      %p214 = scmp.ne.s32.totalorder %s203, %s206
      %p215 = scmp.eq.s32.totalorder %s27, 7
      %p216 = por %p214, %p215
      %p217 = scmp.ne.s32.totalorder %s206, %s207
      %p218 = scmp.eq.s32.totalorder %s27, 0
      %p219 = por %p217, %p218
      %p220 = scmp.ne.s32.totalorder %s206, %s207
      %p221 = scmp.eq.s32.totalorder %s28, 7
      %p222 = por %p220, %p221
      %p224 = scmp.ne.s32.totalorder %s207, %s223
      %p225 = scmp.eq.s32.totalorder %s28, 0
      %p226 = por %p224, %p225
      %s227 = ssub.s32 %s29, %s41
      %p228 = scmp.eq.s32.totalorder %s227, 0
      %s230 = sadd.s32 %s229, 1
      %s231 = scalar_select %p228, %s229, %s230
      %p234 = pneg %p228
      %p235 = scmp.eq.s32.totalorder %s22, 7
      %p236 = por %p234, %p235
      %p237 = scmp.ne.s32.totalorder %s229, %s232
      %p238 = scmp.eq.s32.totalorder %s22, 0
      %p239 = por %p237, %p238
      %p240 = scmp.ne.s32.totalorder %s229, %s232
      %p241 = scmp.eq.s32.totalorder %s27, 7
      %p242 = por %p240, %p241
      %p243 = scmp.ne.s32.totalorder %s232, %s233
      %p244 = scmp.eq.s32.totalorder %s27, 0
      %p245 = por %p243, %p244
      %p246 = scmp.ne.s32.totalorder %s232, %s233
      %p247 = scmp.eq.s32.totalorder %s28, 7
      %p248 = por %p246, %p247
      %p250 = scmp.ne.s32.totalorder %s233, %s249
      %p251 = scmp.eq.s32.totalorder %s28, 0
      %p252 = por %p250, %p251
      %p253 = scmp.le.s32.totalorder 1, %s22
      %p254 = scmp.lt.s32.totalorder %s22, 9
      %p255 = pnand %p253, %p254
      %p256 = pneg %p255
      // Predicated region
      $region9: #{tpu_custom_call.1} parent=5 // pred_check
        _
      $region10: #{tpu_custom_call.1} parent=5 // pred_check_branch
        %258 = sbr.rel (%p255) target = $region12
      $region11: #{tpu_custom_call.1} parent=5 // pred_region
        %s259 = ssub.s32 %s22, 1
        // Predicated region
        $region13: #{tpu_custom_call.1} parent=11 // pred_check
          %p260 = pneg %p60
        $region14: #{tpu_custom_call.1} parent=11 // pred_check_branch
          %262 = sbr.rel (%p260) target = $region16
        $region15: #{tpu_custom_call.1} parent=11 // pred_region
          %s264 = ssub.s32 64, 64
          %265 = vsyncadd [#allocation5], %s264
          %s266 = smul.addr %s31, 64
          %s267 = scalar_lea.hbm %s0, %s266
          %s269 = sshll.u32 [#allocation4], 4
          %s270 = int_to_ptr.vmem [resolvable:$true] %s269
          %272 = dma.hbm_to_vmem [thread:$0]  %s267, 64, %s270, [#allocation5]
        $region16: #{tpu_custom_call.1} parent=11 // pred_fallthru
          _
        // Predicated region
        $region17: #{tpu_custom_call.1} parent=11 // pred_check
          %p273 = pneg %p86
        $region18: #{tpu_custom_call.1} parent=11 // pred_check_branch
          %275 = sbr.rel (%p273) target = $region20
        $region19: #{tpu_custom_call.1} parent=11 // pred_region
          %s277 = ssub.s32 128, 128
          %278 = vsyncadd [#allocation8], %s277
          %s279 = smul.addr %s31, 128
          %s280 = scalar_lea.hbm %s1, %s279
          %s282 = sshll.u32 [#allocation7], 4
          %s283 = int_to_ptr.vmem [resolvable:$true] %s282
          %285 = dma.hbm_to_vmem [thread:$0]  %s280, 128, %s283, [#allocation8]
        $region20: #{tpu_custom_call.1} parent=11 // pred_fallthru
          _
        // Predicated region
        $region21: #{tpu_custom_call.1} parent=11 // pred_check
          %p286 = pneg %p107
        $region22: #{tpu_custom_call.1} parent=11 // pred_check_branch
          %288 = sbr.rel (%p286) target = $region24
        $region23: #{tpu_custom_call.1} parent=11 // pred_region
          %s290 = ssub.s32 256, 256
          %291 = vsyncadd [#allocation8], %s290
          %s292 = sshll.u32 [#allocation9], 4
          %s293 = int_to_ptr.vmem [resolvable:$true] %s292
          %298 = dma.hbm_to_vmem [thread:$0]  %s2, 256, %s293, [#allocation8], 128, 128, 8
        $region24: #{tpu_custom_call.1} parent=11 // pred_fallthru
          _
        // Predicated region
        $region25: #{tpu_custom_call.1} parent=11 // pred_check
          %p299 = pneg %p128
        $region26: #{tpu_custom_call.1} parent=11 // pred_check_branch
          %301 = sbr.rel (%p299) target = $region28
        $region27: #{tpu_custom_call.1} parent=11 // pred_region
          %s303 = ssub.s32 2048, 2048
          %304 = vsyncadd [#allocation11], %s303
          %s305 = sshll.u32 [#allocation10], 4
          %s306 = int_to_ptr.vmem [resolvable:$true] %s305
          %311 = dma.hbm_to_vmem [thread:$0]  %s3, 2048, %s306, [#allocation11], 128, 128, 8
        $region28: #{tpu_custom_call.1} parent=11 // pred_fallthru
          _
        // Predicated region
        $region29: #{tpu_custom_call.1} parent=11 // pred_check
          %p312 = pneg %p149
        $region30: #{tpu_custom_call.1} parent=11 // pred_check_branch
          %314 = sbr.rel (%p312) target = $region32
        $region31: #{tpu_custom_call.1} parent=11 // pred_region
          _
        $region32: #{tpu_custom_call.1} parent=11 // pred_fallthru
          _
        // Predicated region
        $region33: #{tpu_custom_call.1} parent=11 // pred_check
          %p315 = pneg %p170
        $region34: #{tpu_custom_call.1} parent=11 // pred_check_branch
          %317 = sbr.rel (%p315) target = $region36
        $region35: #{tpu_custom_call.1} parent=11 // pred_region
          %s319 = ssub.s32 1024, 1024
          %320 = vsyncadd [#allocation11], %s319
          %s321 = sshll.u32 [#allocation12], 4
          %s322 = int_to_ptr.vmem [resolvable:$true] %s321
          %327 = dma.hbm_to_vmem [thread:$0]  %s5, 1024, %s322, [#allocation11], 64, 64, 4
        $region36: #{tpu_custom_call.1} parent=11 // pred_fallthru
          _
        // Predicated region
        $region37: #{tpu_custom_call.1} parent=11 // pred_check
          %p328 = pneg %p191
        $region38: #{tpu_custom_call.1} parent=11 // pred_check_branch
          %330 = sbr.rel (%p328) target = $region40
        $region39: #{tpu_custom_call.1} parent=11 // pred_region
          _
        $region40: #{tpu_custom_call.1} parent=11 // pred_fallthru
          _
      $region12: #{tpu_custom_call.1} parent=5 // pred_fallthru
        _
      %p331 = scmp.lt.s32.totalorder %s22, 8
      // Predicated region
      $region41: #{tpu_custom_call.1} parent=5 // pred_check
        %p332 = pneg %p331
      $region42: #{tpu_custom_call.1} parent=5 // pred_check_branch
        %334 = sbr.rel (%p332) target = $region44
      $region43: #{tpu_custom_call.1} parent=5 // pred_region
        _
      $region44: #{tpu_custom_call.1} parent=5 // pred_fallthru
        _
      %p335 = scmp.le.s32.totalorder 1, %s22
      %p336 = scmp.lt.s32.totalorder %s22, 9
      %p337 = pnand %p335, %p336
      %p338 = pneg %p337
      // Predicated region
      $region45: #{tpu_custom_call.1} parent=5 // pred_check
        _
      $region46: #{tpu_custom_call.1} parent=5 // pred_check_branch
        %340 = sbr.rel (%p337) target = $region48
      $region47: #{tpu_custom_call.1} parent=5 // pred_region
        %s341 = ssub.s32 %s22, 1
        // Predicated region
        $region49: #{tpu_custom_call.1} parent=47 // pred_check
          %p342 = pneg %p60
        $region50: #{tpu_custom_call.1} parent=47 // pred_check_branch
          %344 = sbr.rel (%p342) target = $region52
        $region51: #{tpu_custom_call.1} parent=47 // pred_region
          %345 = dma.done [#allocation5], 64
        $region52: #{tpu_custom_call.1} parent=47 // pred_fallthru
          _
        // Predicated region
        $region53: #{tpu_custom_call.1} parent=47 // pred_check
          %p346 = pneg %p86
        $region54: #{tpu_custom_call.1} parent=47 // pred_check_branch
          %348 = sbr.rel (%p346) target = $region56
        $region55: #{tpu_custom_call.1} parent=47 // pred_region
          %349 = dma.done [#allocation8], 128
        $region56: #{tpu_custom_call.1} parent=47 // pred_fallthru
          _
        // Predicated region
        $region57: #{tpu_custom_call.1} parent=47 // pred_check
          %p350 = pneg %p107
        $region58: #{tpu_custom_call.1} parent=47 // pred_check_branch
          %352 = sbr.rel (%p350) target = $region60
        $region59: #{tpu_custom_call.1} parent=47 // pred_region
          %353 = dma.done [#allocation8], 256
        $region60: #{tpu_custom_call.1} parent=47 // pred_fallthru
          _
        // Predicated region
        $region61: #{tpu_custom_call.1} parent=47 // pred_check
          %p354 = pneg %p128
        $region62: #{tpu_custom_call.1} parent=47 // pred_check_branch
          %356 = sbr.rel (%p354) target = $region64
        $region63: #{tpu_custom_call.1} parent=47 // pred_region
          %357 = dma.done [#allocation11], 2048
        $region64: #{tpu_custom_call.1} parent=47 // pred_fallthru
          _
        // Predicated region
        $region65: #{tpu_custom_call.1} parent=47 // pred_check
          %p358 = pneg %p170
        $region66: #{tpu_custom_call.1} parent=47 // pred_check_branch
          %360 = sbr.rel (%p358) target = $region68
        $region67: #{tpu_custom_call.1} parent=47 // pred_region
          %361 = dma.done [#allocation11], 1024
        $region68: #{tpu_custom_call.1} parent=47 // pred_fallthru
          _
        %p362 = pneg %p60
        %p363 = pneg %p57
        %p364 = pneg %p86
        %p365 = pneg %p83
        %p366 = pneg %p107
        %p367 = pneg %p104
        %p368 = pneg %p128
        %p369 = pneg %p125
        %p370 = pneg %p149
        %p371 = pneg %p146
        %p372 = pneg %p170
        %p373 = pneg %p167
        %p374 = pneg %p191
        %p375 = pneg %p188
        %p376 = pneg %p219
        %p377 = pneg %p216
        %s378 = sand.u32 %s206, 1
        %s379 = scalar_lea.sflag [#allocation6], %s378
        %s380 = sand.u32 %s206, 1
        %s381 = smul.addr %s380, 8
        %s382 = scalar_lea.vmem [#allocation13], %s381
        %p383 = pneg %p245
        %p384 = pneg %p242
        %p386 = scmp.eq.s32.totalorder %s32, 0
        // Predicated region
        $region69: #{tpu_custom_call.1} parent=47 // pred_check
          %p387 = pneg %p386
        $region70: #{tpu_custom_call.1} parent=47 // pred_check_branch
          %389 = sbr.rel (%p387) target = $region72
        $region71: #{tpu_custom_call.1} parent=47 // pred_region
          %v390 = vld [vmem:[#allocation4] sm:$0xf]
          %v391 = vld [vmem:[#allocation9] sm:$0xff]
          %v392 = vld [vmem:[#allocation9 + $0x8] sm:$0xff]
          %v393 = vld [vmem:[%s4] sm:$0x3]
          %v395 = vlaneseq
          %v396 = vshrl.u32 %v395, 7
          %v397 = vsub.s32 0, %v396
          %v398 = vrot.slane %v393, %v397
          %v399 = vlaneseq
          %v400 = vshrl.u32 %v399, 7
          %v401 = vsub.s32 1, %v400
          %v402 = vrot.slane %v393, %v401
          %v407 = vunpack.c.l.b16 %v391
          %v408 = vunpack.c.h.b16 %v391
          %v409 = vunpack.c.l.b16 %v392
          %v410 = vunpack.c.h.b16 %v392
          %v411 = vpack.c.b16 %v409, %v407
          %v412 = vpack.c.b16 %v410, %v408
          %vm415 = vcmask 130048
          %v417 = vsel %vm415, %v390, 0
          %419 = vmatprep.subr.bf16.mxu0 %v412
          %420 = vmatpush1.bf16.msra.mxu0 %v411
          %421 = vmatprep.subr.bf16.mxu0 0
          %422 = vmatpush1.bf16.msra.mxu0 0
          %423 = vmatprep.subr.bf16.mxu0 0
          %424 = vmatpush1.bf16.msra.mxu0 0
          %425 = vmatprep.subr.bf16.mxu0 0
          %426 = vmatpush1.bf16.msra.mxu0 0
          %427 = vmatprep.subr.bf16.mxu0 0
          %428 = vmatpush1.bf16.msra.mxu0 0
          %429 = vmatprep.subr.bf16.mxu0 0
          %430 = vmatpush1.bf16.msra.mxu0 0
          %431 = vmatprep.subr.bf16.mxu0 0
          %432 = vmatpush1.bf16.msra.mxu0 0
          %433 = vmatprep.subr.bf16.mxu0 0
          %434 = vmatpush1.bf16.msra.mxu0 0
          %435 = vmatprep.subr.bf16.mxu0 0
          %436 = vmatpush1.bf16.msra.mxu0 0
          %437 = vmatprep.subr.bf16.mxu0 0
          %438 = vmatpush1.bf16.msra.mxu0 0
          %439 = vmatprep.subr.bf16.mxu0 0
          %440 = vmatpush1.bf16.msra.mxu0 0
          %441 = vmatprep.subr.bf16.mxu0 0
          %442 = vmatpush1.bf16.msra.mxu0 0
          %443 = vmatprep.subr.bf16.mxu0 0
          %444 = vmatpush1.bf16.msra.mxu0 0
          %445 = vmatprep.subr.bf16.mxu0 0
          %446 = vmatpush1.bf16.msra.mxu0 0
          %447 = vmatprep.subr.bf16.mxu0 0
          %448 = vmatpush1.bf16.msra.mxu0 0
          %449 = vmatprep.subr.bf16.mxu0 0
          %450 = vmatpush1.bf16.msra.mxu0 0
          %451 = vmatprep.mubr.bf16.mxu0 0
          %452 = vmatmul.mubr.bf16.gmra.mrb[0].mxu0 %v417
          %v453 = vpop.f32.mrb[0].mxu0
          %v454 = vadd.f32 %v398, %v453
          %v455 = vpop.f32.mrb[0].mxu0
          %v456 = vadd.f32 %v402, %v455
          %v457 = vpop.f32.mrb[0].mxu0
          %v458 = vpop.f32.mrb[0].mxu0
          %459 = vdwg.mxu0
          %460 = vst [vmem:[#allocation3] sm:$0xff] %v454
          %461 = vst [vmem:[#allocation3 + $0x8] sm:$0xff] %v456
          %v462 = vld [vmem:[#allocation7] sm:$0xff]
          %463 = vst [vmem:[#allocation2] sm:$0xff] %v462
        $region72: #{tpu_custom_call.1} parent=47 // pred_fallthru
          _
        %v464 = vld [vmem:[#allocation2] sm:$0xff]
        %v465 = vld [vmem:[#allocation3] sm:$0xff]
        %v466 = vld [vmem:[#allocation3 + $0x8] sm:$0xff]
        %v467 = vpack.c.bf16 %v464, %v464
        %v468 = vld [vmem:[#allocation10] sm:$0xff]
        %v469 = vld [vmem:[#allocation10 + $0x8] sm:$0xff]
        %v470 = vld [vmem:[#allocation10 + $0x10] sm:$0xff]
        %v471 = vld [vmem:[#allocation10 + $0x18] sm:$0xff]
        %v472 = vld [vmem:[#allocation10 + $0x20] sm:$0xff]
        %v473 = vld [vmem:[#allocation10 + $0x28] sm:$0xff]
        %v474 = vld [vmem:[#allocation10 + $0x30] sm:$0xff]
        %v475 = vld [vmem:[#allocation10 + $0x38] sm:$0xff]
        %v476 = vld [vmem:[#allocation10 + $0x40] sm:$0xff]
        %v477 = vld [vmem:[#allocation10 + $0x48] sm:$0xff]
        %v478 = vld [vmem:[#allocation10 + $0x50] sm:$0xff]
        %v479 = vld [vmem:[#allocation10 + $0x58] sm:$0xff]
        %v480 = vld [vmem:[#allocation10 + $0x60] sm:$0xff]
        %v481 = vld [vmem:[#allocation10 + $0x68] sm:$0xff]
        %v482 = vld [vmem:[#allocation10 + $0x70] sm:$0xff]
        %v483 = vld [vmem:[#allocation10 + $0x78] sm:$0xff]
        %v500 = vunpack.c.l.b16 %v468
        %v501 = vunpack.c.h.b16 %v468
        %v502 = vunpack.c.l.b16 %v469
        %v503 = vunpack.c.h.b16 %v469
        %v504 = vunpack.c.l.b16 %v470
        %v505 = vunpack.c.h.b16 %v470
        %v506 = vunpack.c.l.b16 %v471
        %v507 = vunpack.c.h.b16 %v471
        %v508 = vunpack.c.l.b16 %v472
        %v509 = vunpack.c.h.b16 %v472
        %v510 = vunpack.c.l.b16 %v473
        %v511 = vunpack.c.h.b16 %v473
        %v512 = vunpack.c.l.b16 %v474
        %v513 = vunpack.c.h.b16 %v474
        %v514 = vunpack.c.l.b16 %v475
        %v515 = vunpack.c.h.b16 %v475
        %v516 = vunpack.c.l.b16 %v476
        %v517 = vunpack.c.h.b16 %v476
        %v518 = vunpack.c.l.b16 %v477
        %v519 = vunpack.c.h.b16 %v477
        %v520 = vunpack.c.l.b16 %v478
        %v521 = vunpack.c.h.b16 %v478
        %v522 = vunpack.c.l.b16 %v479
        %v523 = vunpack.c.h.b16 %v479
        %v524 = vunpack.c.l.b16 %v480
        %v525 = vunpack.c.h.b16 %v480
        %v526 = vunpack.c.l.b16 %v481
        %v527 = vunpack.c.h.b16 %v481
        %v528 = vunpack.c.l.b16 %v482
        %v529 = vunpack.c.h.b16 %v482
        %v530 = vunpack.c.l.b16 %v483
        %v531 = vunpack.c.h.b16 %v483
        %v532 = vpack.c.b16 %v502, %v500
        %v533 = vpack.c.b16 %v503, %v501
        %v534 = vpack.c.b16 %v506, %v504
        %v535 = vpack.c.b16 %v507, %v505
        %v536 = vpack.c.b16 %v510, %v508
        %v537 = vpack.c.b16 %v511, %v509
        %v538 = vpack.c.b16 %v514, %v512
        %v539 = vpack.c.b16 %v515, %v513
        %v540 = vpack.c.b16 %v518, %v516
        %v541 = vpack.c.b16 %v519, %v517
        %v542 = vpack.c.b16 %v522, %v520
        %v543 = vpack.c.b16 %v523, %v521
        %v544 = vpack.c.b16 %v526, %v524
        %v545 = vpack.c.b16 %v527, %v525
        %v546 = vpack.c.b16 %v530, %v528
        %v547 = vpack.c.b16 %v531, %v529
        %564 = vmatprep.subr.bf16.mxu0 %v533
        %565 = vmatpush1.bf16.msra.mxu0 %v532
        %566 = vmatprep.subr.bf16.mxu0 %v535
        %567 = vmatpush1.bf16.msra.mxu0 %v534
        %568 = vmatprep.subr.bf16.mxu0 %v537
        %569 = vmatpush1.bf16.msra.mxu0 %v536
        %570 = vmatprep.subr.bf16.mxu0 %v539
        %571 = vmatpush1.bf16.msra.mxu0 %v538
        %572 = vmatprep.subr.bf16.mxu0 %v541
        %573 = vmatpush1.bf16.msra.mxu0 %v540
        %574 = vmatprep.subr.bf16.mxu0 %v543
        %575 = vmatpush1.bf16.msra.mxu0 %v542
        %576 = vmatprep.subr.bf16.mxu0 %v545
        %577 = vmatpush1.bf16.msra.mxu0 %v544
        %578 = vmatprep.subr.bf16.mxu0 %v547
        %579 = vmatpush1.bf16.msra.mxu0 %v546
        %580 = vmatprep.subr.bf16.mxu0 0
        %581 = vmatpush1.bf16.msra.mxu0 0
        %582 = vmatprep.subr.bf16.mxu0 0
        %583 = vmatpush1.bf16.msra.mxu0 0
        %584 = vmatprep.subr.bf16.mxu0 0
        %585 = vmatpush1.bf16.msra.mxu0 0
        %586 = vmatprep.subr.bf16.mxu0 0
        %587 = vmatpush1.bf16.msra.mxu0 0
        %588 = vmatprep.subr.bf16.mxu0 0
        %589 = vmatpush1.bf16.msra.mxu0 0
        %590 = vmatprep.subr.bf16.mxu0 0
        %591 = vmatpush1.bf16.msra.mxu0 0
        %592 = vmatprep.subr.bf16.mxu0 0
        %593 = vmatpush1.bf16.msra.mxu0 0
        %594 = vmatprep.subr.bf16.mxu0 0
        %595 = vmatpush1.bf16.msra.mxu0 0
        %596 = vmatprep.mubr.bf16.mxu0 0
        %597 = vmatmul.mubr.bf16.gmra.mrb[0].mxu0 %v467
        %v598 = vpop.f32.mrb[0].mxu0
        %v599 = vadd.f32 0.0, %v598
        %v600 = vpop.f32.mrb[0].mxu0
        %v601 = vadd.f32 0.0, %v600
        %v602 = vpop.f32.mrb[0].mxu0
        %v603 = vpop.f32.mrb[0].mxu0
        %604 = vdwg.mxu0
        %v605 = vadd.f32 %v465, %v599
        %v606 = vadd.f32 %v466, %v601
        %v607 = vxor.u32 %v605, 2147483648
        %v608 = vmul.f32 %v607, 1.442695
        %v609 = vpow.pop %v608
        %v610 = vadd.f32 %v609, 1.0
        %v611 = vrcp.pop %v610
        %v612 = vmul.f32 1.0, %v611
        %v613 = vxor.u32 %v606, 2147483648
        %v614 = vmul.f32 %v613, 1.442695
        %v615 = vpow.pop %v614
        %v616 = vadd.f32 %v615, 1.0
        %v617 = vrcp.pop %v616
        %v618 = vmul.f32 1.0, %v617
        %v619 = vsub.f32 1.0, %v464
        %v620 = vmul.f32 %v612, %v619
        %v621 = vsub.f32 1.0, %v618
        %v622 = vmul.f32 %v621, %v464
        %v623 = vadd.f32 %v620, %v622
        %624 = vst [vmem:[#allocation2] sm:$0xff] %v623
        %v625 = vpack.c.bf16 %v623, %v623
        %v626 = vld [vmem:[#allocation12] sm:$0xf]
        %v627 = vld [vmem:[#allocation12 + $0x4] sm:$0xf]
        %v628 = vld [vmem:[#allocation12 + $0x8] sm:$0xf]
        %v629 = vld [vmem:[#allocation12 + $0xc] sm:$0xf]
        %v630 = vld [vmem:[#allocation12 + $0x10] sm:$0xf]
        %v631 = vld [vmem:[#allocation12 + $0x14] sm:$0xf]
        %v632 = vld [vmem:[#allocation12 + $0x18] sm:$0xf]
        %v633 = vld [vmem:[#allocation12 + $0x1c] sm:$0xf]
        %v634 = vld [vmem:[#allocation12 + $0x20] sm:$0xf]
        %v635 = vld [vmem:[#allocation12 + $0x24] sm:$0xf]
        %v636 = vld [vmem:[#allocation12 + $0x28] sm:$0xf]
        %v637 = vld [vmem:[#allocation12 + $0x2c] sm:$0xf]
        %v638 = vld [vmem:[#allocation12 + $0x30] sm:$0xf]
        %v639 = vld [vmem:[#allocation12 + $0x34] sm:$0xf]
        %v640 = vld [vmem:[#allocation12 + $0x38] sm:$0xf]
        %v641 = vld [vmem:[#allocation12 + $0x3c] sm:$0xf]
        %v642 = vld [vmem:[%s6] sm:$0x1]
        %v644 = vlaneseq
        %v645 = vshrl.u32 %v644, 7
        %v646 = vsub.s32 0, %v645
        %v647 = vrot.slane %v642, %v646
        %v665 = vunpack.c.l.b16 %v626
        %v666 = vunpack.c.l.b16 %v627
        %v667 = vunpack.c.l.b16 %v628
        %v668 = vunpack.c.l.b16 %v629
        %v669 = vunpack.c.l.b16 %v630
        %v670 = vunpack.c.l.b16 %v631
        %v671 = vunpack.c.l.b16 %v632
        %v672 = vunpack.c.l.b16 %v633
        %v673 = vunpack.c.l.b16 %v634
        %v674 = vunpack.c.l.b16 %v635
        %v675 = vunpack.c.l.b16 %v636
        %v676 = vunpack.c.l.b16 %v637
        %v677 = vunpack.c.l.b16 %v638
        %v678 = vunpack.c.l.b16 %v639
        %v679 = vunpack.c.l.b16 %v640
        %v680 = vunpack.c.l.b16 %v641
        %v681 = vpack.c.b16 %v666, %v665
        %v682 = vpack.c.b16 %v668, %v667
        %v683 = vpack.c.b16 %v670, %v669
        %v684 = vpack.c.b16 %v672, %v671
        %v685 = vpack.c.b16 %v674, %v673
        %v686 = vpack.c.b16 %v676, %v675
        %v687 = vpack.c.b16 %v678, %v677
        %v688 = vpack.c.b16 %v680, %v679
        %697 = vmatprep.subr.bf16.mxu0 0
        %698 = vmatpush1.bf16.msra.mxu0 %v681
        %699 = vmatprep.subr.bf16.mxu0 0
        %700 = vmatpush1.bf16.msra.mxu0 %v682
        %701 = vmatprep.subr.bf16.mxu0 0
        %702 = vmatpush1.bf16.msra.mxu0 %v683
        %703 = vmatprep.subr.bf16.mxu0 0
        %704 = vmatpush1.bf16.msra.mxu0 %v684
        %705 = vmatprep.subr.bf16.mxu0 0
        %706 = vmatpush1.bf16.msra.mxu0 %v685
        %707 = vmatprep.subr.bf16.mxu0 0
        %708 = vmatpush1.bf16.msra.mxu0 %v686
        %709 = vmatprep.subr.bf16.mxu0 0
        %710 = vmatpush1.bf16.msra.mxu0 %v687
        %711 = vmatprep.subr.bf16.mxu0 0
        %712 = vmatpush1.bf16.msra.mxu0 %v688
        %713 = vmatprep.subr.bf16.mxu0 0
        %714 = vmatpush1.bf16.msra.mxu0 0
        %715 = vmatprep.subr.bf16.mxu0 0
        %716 = vmatpush1.bf16.msra.mxu0 0
        %717 = vmatprep.subr.bf16.mxu0 0
        %718 = vmatpush1.bf16.msra.mxu0 0
        %719 = vmatprep.subr.bf16.mxu0 0
        %720 = vmatpush1.bf16.msra.mxu0 0
        %721 = vmatprep.subr.bf16.mxu0 0
        %722 = vmatpush1.bf16.msra.mxu0 0
        %723 = vmatprep.subr.bf16.mxu0 0
        %724 = vmatpush1.bf16.msra.mxu0 0
        %725 = vmatprep.subr.bf16.mxu0 0
        %726 = vmatpush1.bf16.msra.mxu0 0
        %727 = vmatprep.subr.bf16.mxu0 0
        %728 = vmatpush1.bf16.msra.mxu0 0
        %729 = vmatprep.mubr.bf16.mxu0 0
        %730 = vmatmul.mubr.bf16.gmra.mrb[0].mxu0 %v625
        %v731 = vpop.f32.mrb[0].mxu0
        %v732 = vadd.f32 %v647, %v731
        %v733 = vpop.f32.mrb[0].mxu0
        %v734 = vpop.f32.mrb[0].mxu0
        %v735 = vpop.f32.mrb[0].mxu0
        %736 = vdwg.mxu0
        %737 = vst [vmem:[%s382] sm:$0xff] %v732
        %p738 = scmp.eq.s32.totalorder %s32, 7
        // Predicated region
        $region73: #{tpu_custom_call.1} parent=47 // pred_check
          %p739 = pneg %p738
        $region74: #{tpu_custom_call.1} parent=47 // pred_check_branch
          %741 = sbr.rel (%p739) target = $region76
        $region75: #{tpu_custom_call.1} parent=47 // pred_region
          %742 = vst [vmem:[#allocation14] sm:$0xff] %v623
        $region76: #{tpu_custom_call.1} parent=47 // pred_fallthru
          _
        %s743 = sand.u32 %s206, 1
        %s744 = scalar_lea.sflag [#allocation6], %s743
        %s745 = sand.u32 %s206, 1
        %s746 = smul.addr %s745, 8
        %s747 = scalar_lea.vmem [#allocation13], %s746
        // Predicated region
        $region77: #{tpu_custom_call.1} parent=47 // pred_check
          %p748 = pneg %p216
        $region78: #{tpu_custom_call.1} parent=47 // pred_check_branch
          %750 = sbr.rel (%p748) target = $region80
        $region79: #{tpu_custom_call.1} parent=47 // pred_region
          %s752 = ssub.s32 128, 128
          %753 = vsyncadd %s744, %s752
          %s754 = sadd.s32 %s31, %s32
          %s755 = smul.addr %s754, 128
          %s756 = scalar_lea.hbm %s7, %s755
          %s758 = sshll.u32 %s747, 4
          %s759 = int_to_ptr.vmem [resolvable:$true] %s758
          %761 = dma.vmem_to_hbm [thread:$0]  %s759, 128, %s756, %s744
        $region80: #{tpu_custom_call.1} parent=47 // pred_fallthru
          _
        // Predicated region
        $region81: #{tpu_custom_call.1} parent=47 // pred_check
          %p762 = pneg %p242
        $region82: #{tpu_custom_call.1} parent=47 // pred_check_branch
          %764 = sbr.rel (%p762) target = $region84
        $region83: #{tpu_custom_call.1} parent=47 // pred_region
          %s766 = ssub.s32 128, 128
          %767 = vsyncadd [#allocation15], %s766
          %s768 = smul.addr %s31, 128
          %s769 = scalar_lea.hbm %s8, %s768
          %s771 = sshll.u32 [#allocation14], 4
          %s772 = int_to_ptr.vmem [resolvable:$true] %s771
          %774 = dma.vmem_to_hbm [thread:$0]  %s772, 128, %s769, [#allocation15]
        $region84: #{tpu_custom_call.1} parent=47 // pred_fallthru
          _
        // Predicated region
        $region85: #{tpu_custom_call.1} parent=47 // pred_check
          %p775 = pneg %p242
        $region86: #{tpu_custom_call.1} parent=47 // pred_check_branch
          %777 = sbr.rel (%p775) target = $region88
        $region87: #{tpu_custom_call.1} parent=47 // pred_region
          %778 = dma.done [#allocation15], 128
        $region88: #{tpu_custom_call.1} parent=47 // pred_fallthru
          _
      $region48: #{tpu_custom_call.1} parent=5 // pred_fallthru
        _
      %p779 = scmp.le.s32.totalorder 2, %s22
      // Predicated region
      $region89: #{tpu_custom_call.1} parent=5 // pred_check
        %p780 = pneg %p779
      $region90: #{tpu_custom_call.1} parent=5 // pred_check_branch
        %782 = sbr.rel (%p780) target = $region92
      $region91: #{tpu_custom_call.1} parent=5 // pred_region
        %s783 = ssub.s32 %s22, 2
        // Predicated region
        $region93: #{tpu_custom_call.1} parent=91 // pred_check
          %p784 = pneg %p222
        $region94: #{tpu_custom_call.1} parent=91 // pred_check_branch
          %786 = sbr.rel (%p784) target = $region96
        $region95: #{tpu_custom_call.1} parent=91 // pred_region
          %s787 = sand.u32 %s207, 1
          %s788 = scalar_lea.sflag [#allocation6], %s787
          %s789 = sand.u32 %s207, 1
          %s790 = smul.addr %s789, 8
          %s791 = scalar_lea.vmem [#allocation13], %s790
          %792 = dma.done %s788, 128
        $region96: #{tpu_custom_call.1} parent=91 // pred_fallthru
          _
      $region92: #{tpu_custom_call.1} parent=5 // pred_fallthru
        _
    $region6: #{tpu_custom_call.1} parent=1 // loop_footer
      %s26 = sadd.s32 1, %s22
    $region7: #{tpu_custom_call.1} parent=1 // loop_footer_branch
      %21 = sbr.rel target = $region3
    $region8: #{tpu_custom_call.1} parent=1 // loop_exit
      _
    %793 = vsyncpa [#allocation5], 1
    %s794 = scalar_lea.sflag [#allocation5], 1
    %795 = vsyncpa %s794, 1
    %796 = vsyncpa [#allocation8], 1
    %797 = vsyncpa [#allocation11], 1
    %798 = vsyncpa [#allocation6], 1
    %s799 = scalar_lea.sflag [#allocation6], 1
    %800 = vsyncpa %s799, 1
    %801 = vsyncpa [#allocation15], 1

</llo_original>
